<compile_context>
chip_gen: v5e
topology: v5e:2x2
jax: 0.10.0
libtpu: 0.0.40
codegen_flags: <defaults>
</compile_context>

<pallas_src>
import jax
import jax.numpy as jnp
from jax.experimental import pallas as pl
from jax.experimental.pallas import tpu as pltpu

IN_DIM = 784
H_DIM = 16
OUT_DIM = 10


def _round_up(n, m):
    return ((n + m - 1) // m) * m


def _tensorcores_per_device():
    """Best-effort count of TensorCores one pallas_call can shard across."""
    try:
        info = pltpu.get_tpu_info()
        for attr in ("num_cores", "tensorcore_count", "num_tensorcores",
                     "cores_per_chip"):
            n = getattr(info, attr, None)
            if isinstance(n, int) and n > 0:
                return n
    except Exception:
        pass
    try:
        kind = jax.devices()[0].device_kind.lower()
        if "7" in kind:        # v7x exposes 2 TensorCores per device
            return 2
    except Exception:
        pass
    return 1                   # v5e / v6e: single TensorCore


def _choose_tiles(B, block_m):
    """Pick (batch tile, number of grid steps)."""
    n_tc = _tensorcores_per_device()
    if B <= block_m:
        # Single-TC chips (v5e/v6e): one tile — the grid is a serial loop,
        # so extra steps just add ~0.35 us each with zero overlap benefit.
        bm = _round_up(max(B, 1), 8)
        n_tiles = 1
        # 2-TC chips (v7x): split a moderately sized batch evenly across the
        # cores; for tiny batches (e.g. the 64-row DataLoader batch) the work
        # is too small for the split to pay for the step overhead.
        if n_tc >= 2 and B >= 512:
            n_tiles = 2
            bm = _round_up(pl.cdiv(B, 2), 8)
    else:
        n_tiles = pl.cdiv(B, block_m)
        if n_tc >= 2:
            # Even, balanced tile count so both TensorCores get equal rows.
            n_tiles = _round_up(n_tiles, n_tc)
        bm = _round_up(pl.cdiv(B, n_tiles), 8)
        n_tiles = pl.cdiv(B, bm)
    return bm, n_tiles


def mlp_kernel(x_ref, w1_ref, b1_ref, w2_ref, b2_ref, w3_ref, b3_ref, o_ref):
    # Layer 1: (bm, 784) @ (784, 16) -> f32 acc, + bias, ReLU
    h1 = jnp.dot(x_ref[...], w1_ref[...], preferred_element_type=jnp.float32)
    h1 = jnp.maximum(h1 + b1_ref[...], 0.0)
    # Layer 2: (bm, 16) @ (16, 16), + bias, ReLU
    h2 = jnp.dot(h1, w2_ref[...], preferred_element_type=jnp.float32)
    h2 = jnp.maximum(h2 + b2_ref[...], 0.0)
    # Layer 3: (bm, 16) @ (16, 10), + bias
    out = jnp.dot(h2, w3_ref[...], preferred_element_type=jnp.float32)
    o_ref[...] = (out + b3_ref[...]).astype(o_ref.dtype)


def mlp_forward(x, w1, b1, w2, b2, w3, b3, *, block_m=1024):
    B = x.shape[0]
    assert x.shape[1] == IN_DIM

    bm, n_tiles = _choose_tiles(B, block_m)

    # Biases as (1, H) rows so they live as 2-D VMEM tiles (few bytes each).
    b1_2d = b1.reshape(1, H_DIM).astype(jnp.float32)
    b2_2d = b2.reshape(1, H_DIM).astype(jnp.float32)
    b3_2d = b3.reshape(1, OUT_DIM).astype(jnp.float32)

    # Weights / biases: full-array blocks with a constant index_map -> the
    # pipeline keeps them resident (no re-DMA across grid steps).
    full = lambda shape: pl.BlockSpec(shape, lambda i: (0, 0))

    out = pl.pallas_call(
        mlp_kernel,
        out_shape=jax.ShapeDtypeStruct((B, OUT_DIM), jnp.float32),
        grid_spec=pltpu.PrefetchScalarGridSpec(
            num_scalar_prefetch=0,
            grid=(n_tiles,),
            in_specs=[
                pl.BlockSpec((bm, IN_DIM), lambda i: (i, 0)),  # x tile (f32)
                full((IN_DIM, H_DIM)),    # w1
                full((1, H_DIM)),         # b1
                full((H_DIM, H_DIM)),     # w2
                full((1, H_DIM)),         # b2
                full((H_DIM, OUT_DIM)),   # w3
                full((1, OUT_DIM)),       # b3
            ],
            out_specs=pl.BlockSpec((bm, OUT_DIM), lambda i: (i, 0)),
        ),
        compiler_params=pltpu.CompilerParams(
            dimension_semantics=("parallel",),
        ),
    )(x.astype(jnp.float32), w1.astype(jnp.float32), b1_2d,
      w2.astype(jnp.float32), b2_2d, w3.astype(jnp.float32), b3_2d)

    return out


def reference_forward(x, w1, b1, w2, b2, w3, b3):
    h1 = jnp.maximum(x @ w1 + b1, 0.0)
    h2 = jnp.maximum(h1 @ w2 + b2, 0.0)
    return h2 @ w3 + b3


if __name__ == "__main__":
    key = jax.random.PRNGKey(0)
    k_x, k_w1, k_b1, k_w2, k_b2, k_w3, k_b3 = jax.random.split(key, 7)

    scale = 1.0 / jnp.sqrt(784.0 / 2.0)  # matches torch.randn(...) / np.sqrt(784/2)

    w1 = jax.random.normal(k_w1, (IN_DIM, H_DIM), dtype=jnp.float32) * scale
    b1 = jax.random.normal(k_b1, (H_DIM,), dtype=jnp.float32)
    w2 = jax.random.normal(k_w2, (H_DIM, H_DIM), dtype=jnp.float32) * scale
    b2 = jax.random.normal(k_b2, (H_DIM,), dtype=jnp.float32)
    w3 = jax.random.normal(k_w3, (H_DIM, OUT_DIM), dtype=jnp.float32) * scale
    b3 = jax.random.normal(k_b3, (OUT_DIM,), dtype=jnp.float32)

    # Case 1: the DataLoader batch size from the reference training loop
    # (single grid step on 1-TC parts).
    B = 64
    x = jax.random.normal(k_x, (B, IN_DIM), dtype=jnp.float32)
    out = jax.block_until_ready(mlp_forward(x, w1, b1, w2, b2, w3, b3))
    ref = reference_forward(x, w1, b1, w2, b2, w3, b3)
    assert out.shape == (B, OUT_DIM)
    assert jnp.allclose(out, ref, atol=1e-2, rtol=1e-2), "mismatch vs reference (B=64)"

    # Case 2: batch not a multiple of 8 (exercises the masked partial tile —
    # no wrapper padding copy anymore).
    B2 = 100
    x2 = jax.random.normal(jax.random.PRNGKey(1), (B2, IN_DIM), dtype=jnp.float32)
    out2 = jax.block_until_ready(mlp_forward(x2, w1, b1, w2, b2, w3, b3))
    ref2 = reference_forward(x2, w1, b1, w2, b2, w3, b3)
    assert out2.shape == (B2, OUT_DIM)
    assert jnp.allclose(out2, ref2, atol=1e-2, rtol=1e-2), "mismatch vs reference (B=100)"

    # Case 3: multi-tile grid with a partial last tile (exercises pipelined
    # x DMA across grid steps + boundary masking).
    B3 = 2500
    x3 = jax.random.normal(jax.random.PRNGKey(2), (B3, IN_DIM), dtype=jnp.float32)
    out3 = jax.block_until_ready(mlp_forward(x3, w1, b1, w2, b2, w3, b3))
    ref3 = reference_forward(x3, w1, b1, w2, b2, w3, b3)
    assert out3.shape == (B3, OUT_DIM)
    assert jnp.allclose(out3, ref3, atol=1e-2, rtol=1e-2), "mismatch vs reference (B=2500)"

    print("KERNEL_OK")
</pallas_src>

<mosaic_0001>
module attributes {stable_mosaic.version = 11 : i64} {
  func.func @mlp_kernel(%arg0: i32, %arg1: memref<64x784xf32, #tpu.memory_space<vmem>>, %arg2: memref<784x16xf32, #tpu.memory_space<vmem>>, %arg3: memref<1x16xf32, #tpu.memory_space<vmem>>, %arg4: memref<16x16xf32, #tpu.memory_space<vmem>>, %arg5: memref<1x16xf32, #tpu.memory_space<vmem>>, %arg6: memref<16x10xf32, #tpu.memory_space<vmem>>, %arg7: memref<1x10xf32, #tpu.memory_space<vmem>>, %arg8: memref<64x10xf32, #tpu.memory_space<vmem>>) attributes {dimension_semantics = [#tpu.dimension_semantics<parallel>], iteration_bounds = array<i64: 1>, scalar_prefetch = 0 : i64, scratch_operands = 0 : i64, tpu.core_type = #tpu.core_type<tc>, window_params = [{transform_indices = @transform_0, window_bounds = array<i64: 64, 784>}, {pipeline_mode = #tpu.pipeline_mode<synchronous>, transform_indices = @transform_1, window_bounds = array<i64: 784, 16>}, {pipeline_mode = #tpu.pipeline_mode<synchronous>, transform_indices = @transform_2, window_bounds = array<i64: 1, 16>}, {pipeline_mode = #tpu.pipeline_mode<synchronous>, transform_indices = @transform_3, window_bounds = array<i64: 16, 16>}, {pipeline_mode = #tpu.pipeline_mode<synchronous>, transform_indices = @transform_4, window_bounds = array<i64: 1, 16>}, {pipeline_mode = #tpu.pipeline_mode<synchronous>, transform_indices = @transform_5, window_bounds = array<i64: 16, 10>}, {pipeline_mode = #tpu.pipeline_mode<synchronous>, transform_indices = @transform_6, window_bounds = array<i64: 1, 10>}, {transform_indices = @transform_7, window_bounds = array<i64: 64, 10>}]} {
    %c0 = arith.constant 0 : index
    %c0_0 = arith.constant 0 : index
    %0 = vector.load %arg1[%c0, %c0_0] : memref<64x784xf32, #tpu.memory_space<vmem>>, vector<64x784xf32>
    %c0_1 = arith.constant 0 : index
    %c0_2 = arith.constant 0 : index
    %1 = vector.load %arg2[%c0_1, %c0_2] : memref<784x16xf32, #tpu.memory_space<vmem>>, vector<784x16xf32>
    %cst = arith.constant dense<0.000000e+00> : vector<64x16xf32>
    %2 = tpu.matmul %0, %1, %cst {dimension_numbers = #tpu.dot_dimension_numbers<[1], [0], [0], [1], [0, 0, 1, 1], [], []>} : vector<64x784xf32>, vector<784x16xf32>, vector<64x16xf32> -> vector<64x16xf32>
    %c0_3 = arith.constant 0 : index
    %c0_4 = arith.constant 0 : index
    %3 = vector.load %arg3[%c0_3, %c0_4] : memref<1x16xf32, #tpu.memory_space<vmem>>, vector<1x16xf32>
    %4 = vector.broadcast %3 : vector<1x16xf32> to vector<64x16xf32>
    %5 = arith.addf %2, %4 : vector<64x16xf32>
    %cst_5 = arith.constant 0.000000e+00 : f32
    %6 = vector.broadcast %cst_5 : f32 to vector<64x16xf32>
    %7 = arith.maximumf %5, %6 : vector<64x16xf32>
    %c0_6 = arith.constant 0 : index
    %c0_7 = arith.constant 0 : index
    %8 = vector.load %arg4[%c0_6, %c0_7] : memref<16x16xf32, #tpu.memory_space<vmem>>, vector<16x16xf32>
    %cst_8 = arith.constant dense<0.000000e+00> : vector<64x16xf32>
    %9 = tpu.matmul %7, %8, %cst_8 {dimension_numbers = #tpu.dot_dimension_numbers<[1], [0], [0], [1], [0, 0, 1, 1], [], []>} : vector<64x16xf32>, vector<16x16xf32>, vector<64x16xf32> -> vector<64x16xf32>
    %c0_9 = arith.constant 0 : index
    %c0_10 = arith.constant 0 : index
    %10 = vector.load %arg5[%c0_9, %c0_10] : memref<1x16xf32, #tpu.memory_space<vmem>>, vector<1x16xf32>
    %11 = vector.broadcast %10 : vector<1x16xf32> to vector<64x16xf32>
    %12 = arith.addf %9, %11 : vector<64x16xf32>
    %cst_11 = arith.constant 0.000000e+00 : f32
    %13 = vector.broadcast %cst_11 : f32 to vector<64x16xf32>
    %14 = arith.maximumf %12, %13 : vector<64x16xf32>
    %c0_12 = arith.constant 0 : index
    %c0_13 = arith.constant 0 : index
    %15 = vector.load %arg6[%c0_12, %c0_13] : memref<16x10xf32, #tpu.memory_space<vmem>>, vector<16x10xf32>
    %cst_14 = arith.constant dense<0.000000e+00> : vector<64x10xf32>
    %16 = tpu.matmul %14, %15, %cst_14 {dimension_numbers = #tpu.dot_dimension_numbers<[1], [0], [0], [1], [0, 0, 1, 1], [], []>} : vector<64x16xf32>, vector<16x10xf32>, vector<64x10xf32> -> vector<64x10xf32>
    %c0_15 = arith.constant 0 : index
    %c0_16 = arith.constant 0 : index
    %17 = vector.load %arg7[%c0_15, %c0_16] : memref<1x10xf32, #tpu.memory_space<vmem>>, vector<1x10xf32>
    %18 = vector.broadcast %17 : vector<1x10xf32> to vector<64x10xf32>
    %19 = arith.addf %16, %18 : vector<64x10xf32>
    %c0_17 = arith.constant 0 : index
    %c0_18 = arith.constant 0 : index
    %20 = vector.load %arg8[%c0_17, %c0_18] : memref<64x10xf32, #tpu.memory_space<vmem>>, vector<64x10xf32>
    tpu.vector_store %arg8[%c0_17, %c0_18], %19 {strides = array<i32>} : memref<64x10xf32, #tpu.memory_space<vmem>>, vector<64x10xf32>,
    return
  }
  func.func @transform_0(%arg0: i32) -> (i32, i32) {
    %c0_i32 = arith.constant 0 : i32
    %c0_i32_0 = arith.constant 0 : i32
    return %arg0, %c0_i32 : i32, i32
  }
  func.func @transform_1(%arg0: i32) -> (i32, i32) {
    %c0_i32 = arith.constant 0 : i32
    %c0_i32_0 = arith.constant 0 : i32
    %c0_i32_1 = arith.constant 0 : i32
    return %c0_i32, %c0_i32_0 : i32, i32
  }
  func.func @transform_2(%arg0: i32) -> (i32, i32) {
    %c0_i32 = arith.constant 0 : i32
    %c0_i32_0 = arith.constant 0 : i32
    %c0_i32_1 = arith.constant 0 : i32
    return %c0_i32, %c0_i32_0 : i32, i32
  }
  func.func @transform_3(%arg0: i32) -> (i32, i32) {
    %c0_i32 = arith.constant 0 : i32
    %c0_i32_0 = arith.constant 0 : i32
    %c0_i32_1 = arith.constant 0 : i32
    return %c0_i32, %c0_i32_0 : i32, i32
  }
  func.func @transform_4(%arg0: i32) -> (i32, i32) {
    %c0_i32 = arith.constant 0 : i32
    %c0_i32_0 = arith.constant 0 : i32
    %c0_i32_1 = arith.constant 0 : i32
    return %c0_i32, %c0_i32_0 : i32, i32
  }
  func.func @transform_5(%arg0: i32) -> (i32, i32) {
    %c0_i32 = arith.constant 0 : i32
    %c0_i32_0 = arith.constant 0 : i32
    %c0_i32_1 = arith.constant 0 : i32
    return %c0_i32, %c0_i32_0 : i32, i32
  }
  func.func @transform_6(%arg0: i32) -> (i32, i32) {
    %c0_i32 = arith.constant 0 : i32
    %c0_i32_0 = arith.constant 0 : i32
    %c0_i32_1 = arith.constant 0 : i32
    return %c0_i32, %c0_i32_0 : i32, i32
  }
  func.func @transform_7(%arg0: i32) -> (i32, i32) {
    %c0_i32 = arith.constant 0 : i32
    %c0_i32_0 = arith.constant 0 : i32
    return %arg0, %c0_i32 : i32, i32
  }
}

</mosaic_0001>

<llo_original>
// kernel: tpu_custom_call.1
$region0: #{tpu_custom_call.1}
  #allocation0 [shape = 'u32[]', space=smem, size = 0x4, offset = 0x4, fixed_abs, tag = 'smem constant byte address 0x4 - core index']
  #allocation1 [shape = 'u32[72,128]{1,0:T(1,128)}', space=vmem, size = 0x9000, scoped, tag = 'internal scratch']
  %s0 = inlined_call_operand.vmem [shape: f32[64,784], index: 0, kind: input, shape index: {}]
  %s1 = inlined_call_operand.vmem [shape: f32[784,16], index: 1, kind: input, shape index: {}]
  %s2 = inlined_call_operand.vmem [shape: f32[1,16], index: 2, kind: input, shape index: {}]
  %s3 = inlined_call_operand.vmem [shape: f32[16,16], index: 3, kind: input, shape index: {}]
  %s4 = inlined_call_operand.vmem [shape: f32[1,16], index: 4, kind: input, shape index: {}]
  %s5 = inlined_call_operand.vmem [shape: f32[16,10], index: 5, kind: input, shape index: {}]
  %s6 = inlined_call_operand.vmem [shape: f32[1,10], index: 6, kind: input, shape index: {}]
  %s7 = inlined_call_operand.vmem [shape: f32[64,10], index: 7, kind: output, shape index: {}]
  %s8 = sld [smem:[#allocation0]]
  $region38: #{tpu_custom_call.1} parent=0
    _
  %s10 = ssub.s32 1, %s8
  %s11 = scalar_select 0, %s10, %s8
  // Predicated region
  $region2: #{tpu_custom_call.1} parent=0 // pred_check
    _
  $region3: #{tpu_custom_call.1} parent=0 // pred_check_branch
    %13 = sbr.rel (0) target = $region5
  $region4: #{tpu_custom_call.1} parent=0 // pred_region
    _
  $region5: #{tpu_custom_call.1} parent=0 // pred_fallthru
    _
  // Predicated region
  $region6: #{tpu_custom_call.1} parent=0 // pred_check
    _
  $region7: #{tpu_custom_call.1} parent=0 // pred_check_branch
    %15 = sbr.rel (0) target = $region9
  $region8: #{tpu_custom_call.1} parent=0 // pred_region
    _
  $region9: #{tpu_custom_call.1} parent=0 // pred_fallthru
    _
  // Predicated region
  $region10: #{tpu_custom_call.1} parent=0 // pred_check
    _
  $region11: #{tpu_custom_call.1} parent=0 // pred_check_branch
    %17 = sbr.rel (0) target = $region13
  $region12: #{tpu_custom_call.1} parent=0 // pred_region
    _
  $region13: #{tpu_custom_call.1} parent=0 // pred_fallthru
    _
  // Predicated region
  $region14: #{tpu_custom_call.1} parent=0 // pred_check
    _
  $region15: #{tpu_custom_call.1} parent=0 // pred_check_branch
    %19 = sbr.rel (0) target = $region17
  $region16: #{tpu_custom_call.1} parent=0 // pred_region
    _
  $region17: #{tpu_custom_call.1} parent=0 // pred_fallthru
    _
  // Predicated region
  $region18: #{tpu_custom_call.1} parent=0 // pred_check
    _
  $region19: #{tpu_custom_call.1} parent=0 // pred_check_branch
    %21 = sbr.rel (0) target = $region21
  $region20: #{tpu_custom_call.1} parent=0 // pred_region
    _
  $region21: #{tpu_custom_call.1} parent=0 // pred_fallthru
    _
  // Predicated region
  $region22: #{tpu_custom_call.1} parent=0 // pred_check
    _
  $region23: #{tpu_custom_call.1} parent=0 // pred_check_branch
    %23 = sbr.rel (0) target = $region25
  $region24: #{tpu_custom_call.1} parent=0 // pred_region
    _
  $region25: #{tpu_custom_call.1} parent=0 // pred_fallthru
    _
  // Predicated region
  $region26: #{tpu_custom_call.1} parent=0 // pred_check
    _
  $region27: #{tpu_custom_call.1} parent=0 // pred_check_branch
    %25 = sbr.rel (0) target = $region29
  $region28: #{tpu_custom_call.1} parent=0 // pred_region
    _
  $region29: #{tpu_custom_call.1} parent=0 // pred_fallthru
    _
  %v26 = vld [vmem:[%s0] sm:$0xff]
  %v27 = vld [vmem:[%s0 + $0x8] sm:$0xff]
  %v28 = vld [vmem:[%s0 + $0x10] sm:$0xff]
  %v29 = vld [vmem:[%s0 + $0x18] sm:$0xff]
  %v30 = vld [vmem:[%s0 + $0x20] sm:$0xff]
  %v31 = vld [vmem:[%s0 + $0x28] sm:$0xff]
  %v32 = vld [vmem:[%s0 + $0x30] sm:$0xff]
  %v33 = vld [vmem:[%s0 + $0x38] sm:$0xff]
  %v34 = vld [vmem:[%s0 + $0x40] sm:$0xff]
  %v35 = vld [vmem:[%s0 + $0x48] sm:$0xff]
  %v36 = vld [vmem:[%s0 + $0x50] sm:$0xff]
  %v37 = vld [vmem:[%s0 + $0x58] sm:$0xff]
  %v38 = vld [vmem:[%s0 + $0x60] sm:$0xff]
  %v39 = vld [vmem:[%s0 + $0x68] sm:$0xff]
  %v40 = vld [vmem:[%s0 + $0x70] sm:$0xff]
  %v41 = vld [vmem:[%s0 + $0x78] sm:$0xff]
  %v42 = vld [vmem:[%s0 + $0x80] sm:$0xff]
  %v43 = vld [vmem:[%s0 + $0x88] sm:$0xff]
  %v44 = vld [vmem:[%s0 + $0x90] sm:$0xff]
  %v45 = vld [vmem:[%s0 + $0x98] sm:$0xff]
  %v46 = vld [vmem:[%s0 + $0xa0] sm:$0xff]
  %v47 = vld [vmem:[%s0 + $0xa8] sm:$0xff]
  %v48 = vld [vmem:[%s0 + $0xb0] sm:$0xff]
  %v49 = vld [vmem:[%s0 + $0xb8] sm:$0xff]
  %v50 = vld [vmem:[%s0 + $0xc0] sm:$0xff]
  %v51 = vld [vmem:[%s0 + $0xc8] sm:$0xff]
  %v52 = vld [vmem:[%s0 + $0xd0] sm:$0xff]
  %v53 = vld [vmem:[%s0 + $0xd8] sm:$0xff]
  %v54 = vld [vmem:[%s0 + $0xe0] sm:$0xff]
  %v55 = vld [vmem:[%s0 + $0xe8] sm:$0xff]
  %v56 = vld [vmem:[%s0 + $0xf0] sm:$0xff]
  %v57 = vld [vmem:[%s0 + $0xf8] sm:$0xff]
  %v58 = vld [vmem:[%s0 + $0x100] sm:$0xff]
  %v59 = vld [vmem:[%s0 + $0x108] sm:$0xff]
  %v60 = vld [vmem:[%s0 + $0x110] sm:$0xff]
  %v61 = vld [vmem:[%s0 + $0x118] sm:$0xff]
  %v62 = vld [vmem:[%s0 + $0x120] sm:$0xff]
  %v63 = vld [vmem:[%s0 + $0x128] sm:$0xff]
  %v64 = vld [vmem:[%s0 + $0x130] sm:$0xff]
  %v65 = vld [vmem:[%s0 + $0x138] sm:$0xff]
  %v66 = vld [vmem:[%s0 + $0x140] sm:$0xff]
  %v67 = vld [vmem:[%s0 + $0x148] sm:$0xff]
  %v68 = vld [vmem:[%s0 + $0x150] sm:$0xff]
  %v69 = vld [vmem:[%s0 + $0x158] sm:$0xff]
  %v70 = vld [vmem:[%s0 + $0x160] sm:$0xff]
  %v71 = vld [vmem:[%s0 + $0x168] sm:$0xff]
  %v72 = vld [vmem:[%s0 + $0x170] sm:$0xff]
  %v73 = vld [vmem:[%s0 + $0x178] sm:$0xff]
  %v74 = vld [vmem:[%s0 + $0x180] sm:$0xff]
  %v75 = vld [vmem:[%s0 + $0x188] sm:$0xff]
  %v76 = vld [vmem:[%s0 + $0x190] sm:$0xff]
  %v77 = vld [vmem:[%s0 + $0x198] sm:$0xff]
  %v78 = vld [vmem:[%s0 + $0x1a0] sm:$0xff]
  %v79 = vld [vmem:[%s0 + $0x1a8] sm:$0xff]
  %v80 = vld [vmem:[%s0 + $0x1b0] sm:$0xff]
  %v81 = vld [vmem:[%s0 + $0x1b8] sm:$0xff]
  %v82 = vld [vmem:[%s1] sm:$0xff]
  %v83 = vld [vmem:[%s1 + $0x8] sm:$0xff]
  %v84 = vld [vmem:[%s1 + $0x10] sm:$0xff]
  %v85 = vld [vmem:[%s1 + $0x18] sm:$0xff]
  %v86 = vld [vmem:[%s1 + $0x20] sm:$0xff]
  %v87 = vld [vmem:[%s1 + $0x28] sm:$0xff]
  %v88 = vld [vmem:[%s1 + $0x30] sm:$0xff]
  %v89 = vld [vmem:[%s1 + $0x38] sm:$0xff]
  %v90 = vld [vmem:[%s1 + $0x40] sm:$0xff]
  %v91 = vld [vmem:[%s1 + $0x48] sm:$0xff]
  %v92 = vld [vmem:[%s1 + $0x50] sm:$0xff]
  %v93 = vld [vmem:[%s1 + $0x58] sm:$0xff]
  %v94 = vld [vmem:[%s1 + $0x60] sm:$0xff]
  %v95 = vld [vmem:[%s1 + $0x68] sm:$0xff]
  %v96 = vld [vmem:[%s1 + $0x70] sm:$0xff]
  %v97 = vld [vmem:[%s1 + $0x78] sm:$0xff]
  %v98 = vld [vmem:[%s1 + $0x80] sm:$0xff]
  %v99 = vld [vmem:[%s1 + $0x88] sm:$0xff]
  %v100 = vld [vmem:[%s1 + $0x90] sm:$0xff]
  %v101 = vld [vmem:[%s1 + $0x98] sm:$0xff]
  %v102 = vld [vmem:[%s1 + $0xa0] sm:$0xff]
  %v103 = vld [vmem:[%s1 + $0xa8] sm:$0xff]
  %v104 = vld [vmem:[%s1 + $0xb0] sm:$0xff]
  %v105 = vld [vmem:[%s1 + $0xb8] sm:$0xff]
  %v106 = vld [vmem:[%s1 + $0xc0] sm:$0xff]
  %v107 = vld [vmem:[%s1 + $0xc8] sm:$0xff]
  %v108 = vld [vmem:[%s1 + $0xd0] sm:$0xff]
  %v109 = vld [vmem:[%s1 + $0xd8] sm:$0xff]
  %v110 = vld [vmem:[%s1 + $0xe0] sm:$0xff]
  %v111 = vld [vmem:[%s1 + $0xe8] sm:$0xff]
  %v112 = vld [vmem:[%s1 + $0xf0] sm:$0xff]
  %v113 = vld [vmem:[%s1 + $0xf8] sm:$0xff]
  %v114 = vld [vmem:[%s1 + $0x100] sm:$0xff]
  %v115 = vld [vmem:[%s1 + $0x108] sm:$0xff]
  %v116 = vld [vmem:[%s1 + $0x110] sm:$0xff]
  %v117 = vld [vmem:[%s1 + $0x118] sm:$0xff]
  %v118 = vld [vmem:[%s1 + $0x120] sm:$0xff]
  %v119 = vld [vmem:[%s1 + $0x128] sm:$0xff]
  %v120 = vld [vmem:[%s1 + $0x130] sm:$0xff]
  %v121 = vld [vmem:[%s1 + $0x138] sm:$0xff]
  %v122 = vld [vmem:[%s1 + $0x140] sm:$0xff]
  %v123 = vld [vmem:[%s1 + $0x148] sm:$0xff]
  %v124 = vld [vmem:[%s1 + $0x150] sm:$0xff]
  %v125 = vld [vmem:[%s1 + $0x158] sm:$0xff]
  %v126 = vld [vmem:[%s1 + $0x160] sm:$0xff]
  %v127 = vld [vmem:[%s1 + $0x168] sm:$0xff]
  %v128 = vld [vmem:[%s1 + $0x170] sm:$0xff]
  %v129 = vld [vmem:[%s1 + $0x178] sm:$0xff]
  %v130 = vld [vmem:[%s1 + $0x180] sm:$0xff]
  %v131 = vld [vmem:[%s1 + $0x188] sm:$0xff]
  %v132 = vld [vmem:[%s1 + $0x190] sm:$0xff]
  %v133 = vld [vmem:[%s1 + $0x198] sm:$0xff]
  %v134 = vld [vmem:[%s1 + $0x1a0] sm:$0xff]
  %v135 = vld [vmem:[%s1 + $0x1a8] sm:$0xff]
  %v136 = vld [vmem:[%s1 + $0x1b0] sm:$0xff]
  %v137 = vld [vmem:[%s1 + $0x1b8] sm:$0xff]
  %v138 = vld [vmem:[%s1 + $0x1c0] sm:$0xff]
  %v139 = vld [vmem:[%s1 + $0x1c8] sm:$0xff]
  %v140 = vld [vmem:[%s1 + $0x1d0] sm:$0xff]
  %v141 = vld [vmem:[%s1 + $0x1d8] sm:$0xff]
  %v142 = vld [vmem:[%s1 + $0x1e0] sm:$0xff]
  %v143 = vld [vmem:[%s1 + $0x1e8] sm:$0xff]
  %v144 = vld [vmem:[%s1 + $0x1f0] sm:$0xff]
  %v145 = vld [vmem:[%s1 + $0x1f8] sm:$0xff]
  %v146 = vld [vmem:[%s1 + $0x200] sm:$0xff]
  %v147 = vld [vmem:[%s1 + $0x208] sm:$0xff]
  %v148 = vld [vmem:[%s1 + $0x210] sm:$0xff]
  %v149 = vld [vmem:[%s1 + $0x218] sm:$0xff]
  %v150 = vld [vmem:[%s1 + $0x220] sm:$0xff]
  %v151 = vld [vmem:[%s1 + $0x228] sm:$0xff]
  %v152 = vld [vmem:[%s1 + $0x230] sm:$0xff]
  %v153 = vld [vmem:[%s1 + $0x238] sm:$0xff]
  %v154 = vld [vmem:[%s1 + $0x240] sm:$0xff]
  %v155 = vld [vmem:[%s1 + $0x248] sm:$0xff]
  %v156 = vld [vmem:[%s1 + $0x250] sm:$0xff]
  %v157 = vld [vmem:[%s1 + $0x258] sm:$0xff]
  %v158 = vld [vmem:[%s1 + $0x260] sm:$0xff]
  %v159 = vld [vmem:[%s1 + $0x268] sm:$0xff]
  %v160 = vld [vmem:[%s1 + $0x270] sm:$0xff]
  %v161 = vld [vmem:[%s1 + $0x278] sm:$0xff]
  %v162 = vld [vmem:[%s1 + $0x280] sm:$0xff]
  %v163 = vld [vmem:[%s1 + $0x288] sm:$0xff]
  %v164 = vld [vmem:[%s1 + $0x290] sm:$0xff]
  %v165 = vld [vmem:[%s1 + $0x298] sm:$0xff]
  %v166 = vld [vmem:[%s1 + $0x2a0] sm:$0xff]
  %v167 = vld [vmem:[%s1 + $0x2a8] sm:$0xff]
  %v168 = vld [vmem:[%s1 + $0x2b0] sm:$0xff]
  %v169 = vld [vmem:[%s1 + $0x2b8] sm:$0xff]
  %v170 = vld [vmem:[%s1 + $0x2c0] sm:$0xff]
  %v171 = vld [vmem:[%s1 + $0x2c8] sm:$0xff]
  %v172 = vld [vmem:[%s1 + $0x2d0] sm:$0xff]
  %v173 = vld [vmem:[%s1 + $0x2d8] sm:$0xff]
  %v174 = vld [vmem:[%s1 + $0x2e0] sm:$0xff]
  %v175 = vld [vmem:[%s1 + $0x2e8] sm:$0xff]
  %v176 = vld [vmem:[%s1 + $0x2f0] sm:$0xff]
  %v177 = vld [vmem:[%s1 + $0x2f8] sm:$0xff]
  %v178 = vld [vmem:[%s1 + $0x300] sm:$0xff]
  %v179 = vld [vmem:[%s1 + $0x308] sm:$0xff]
  %v180 = vld [vmem:[%s2] sm:$0x1]
  %v182 = vperm.slane %v180, 0
  %vm184 = vcmask 130048
  %v186 = vsel %vm184, %v32, 0
  %v189 = vsel %vm184, %v39, 0
  %v192 = vsel %vm184, %v46, 0
  %v195 = vsel %vm184, %v53, 0
  %v198 = vsel %vm184, %v60, 0
  %v201 = vsel %vm184, %v67, 0
  %v204 = vsel %vm184, %v74, 0
  %v207 = vsel %vm184, %v81, 0
  %209 = vmatpush.msra.mxu0 %v97
  %210 = vmatpush.msra.mxu0 %v96
  %211 = vmatpush.msra.mxu0 %v95
  %212 = vmatpush.msra.mxu0 %v94
  %213 = vmatpush.msra.mxu0 %v93
  %214 = vmatpush.msra.mxu0 %v92
  %215 = vmatpush.msra.mxu0 %v91
  %216 = vmatpush.msra.mxu0 %v90
  %217 = vmatpush.msra.mxu0 %v89
  %218 = vmatpush.msra.mxu0 %v88
  %219 = vmatpush.msra.mxu0 %v87
  %220 = vmatpush.msra.mxu0 %v86
  %221 = vmatpush.msra.mxu0 %v85
  %222 = vmatpush.msra.mxu0 %v84
  %223 = vmatpush.msra.mxu0 %v83
  %224 = vmatpush.msra.mxu0 %v82
  %225 = vmatmul.f32.gmra.mxu0 %v26
  %v226 = vpop.f32.mrf.mxu0
  %v227 = vadd.f32 %v182, %v226
  %228 = vmatmul.f32.gmra.mxu0 %v33
  %v229 = vpop.f32.mrf.mxu0
  %v230 = vadd.f32 %v182, %v229
  %231 = vmatmul.f32.gmra.mxu0 %v40
  %v232 = vpop.f32.mrf.mxu0
  %v233 = vadd.f32 %v182, %v232
  %234 = vmatmul.f32.gmra.mxu0 %v47
  %v235 = vpop.f32.mrf.mxu0
  %v236 = vadd.f32 %v182, %v235
  %237 = vmatmul.f32.gmra.mxu0 %v54
  %v238 = vpop.f32.mrf.mxu0
  %v239 = vadd.f32 %v182, %v238
  %240 = vmatmul.f32.gmra.mxu0 %v61
  %v241 = vpop.f32.mrf.mxu0
  %v242 = vadd.f32 %v182, %v241
  %243 = vmatmul.f32.gmra.mxu0 %v68
  %v244 = vpop.f32.mrf.mxu0
  %v245 = vadd.f32 %v182, %v244
  %246 = vmatmul.f32.gmra.mxu0 %v75
  %v247 = vpop.f32.mrf.mxu0
  %v248 = vadd.f32 %v182, %v247
  %249 = vdwg.mxu0
  %250 = vmatpush.msra.mxu0 %v113
  %251 = vmatpush.msra.mxu0 %v112
  %252 = vmatpush.msra.mxu0 %v111
  %253 = vmatpush.msra.mxu0 %v110
  %254 = vmatpush.msra.mxu0 %v109
  %255 = vmatpush.msra.mxu0 %v108
  %256 = vmatpush.msra.mxu0 %v107
  %257 = vmatpush.msra.mxu0 %v106
  %258 = vmatpush.msra.mxu0 %v105
  %259 = vmatpush.msra.mxu0 %v104
  %260 = vmatpush.msra.mxu0 %v103
  %261 = vmatpush.msra.mxu0 %v102
  %262 = vmatpush.msra.mxu0 %v101
  %263 = vmatpush.msra.mxu0 %v100
  %264 = vmatpush.msra.mxu0 %v99
  %265 = vmatpush.msra.mxu0 %v98
  %266 = vmatmul.f32.gmra.mxu0 %v27
  %v267 = vpop.f32.mrf.mxu0
  %v268 = vadd.f32 %v227, %v267
  %269 = vmatmul.f32.gmra.mxu0 %v34
  %v270 = vpop.f32.mrf.mxu0
  %v271 = vadd.f32 %v230, %v270
  %272 = vmatmul.f32.gmra.mxu0 %v41
  %v273 = vpop.f32.mrf.mxu0
  %v274 = vadd.f32 %v233, %v273
  %275 = vmatmul.f32.gmra.mxu0 %v48
  %v276 = vpop.f32.mrf.mxu0
  %v277 = vadd.f32 %v236, %v276
  %278 = vmatmul.f32.gmra.mxu0 %v55
  %v279 = vpop.f32.mrf.mxu0
  %v280 = vadd.f32 %v239, %v279
  %281 = vmatmul.f32.gmra.mxu0 %v62
  %v282 = vpop.f32.mrf.mxu0
  %v283 = vadd.f32 %v242, %v282
  %284 = vmatmul.f32.gmra.mxu0 %v69
  %v285 = vpop.f32.mrf.mxu0
  %v286 = vadd.f32 %v245, %v285
  %287 = vmatmul.f32.gmra.mxu0 %v76
  %v288 = vpop.f32.mrf.mxu0
  %v289 = vadd.f32 %v248, %v288
  %290 = vdwg.mxu0
  %291 = vmatpush.msra.mxu0 %v129
  %292 = vmatpush.msra.mxu0 %v128
  %293 = vmatpush.msra.mxu0 %v127
  %294 = vmatpush.msra.mxu0 %v126
  %295 = vmatpush.msra.mxu0 %v125
  %296 = vmatpush.msra.mxu0 %v124
  %297 = vmatpush.msra.mxu0 %v123
  %298 = vmatpush.msra.mxu0 %v122
  %299 = vmatpush.msra.mxu0 %v121
  %300 = vmatpush.msra.mxu0 %v120
  %301 = vmatpush.msra.mxu0 %v119
  %302 = vmatpush.msra.mxu0 %v118
  %303 = vmatpush.msra.mxu0 %v117
  %304 = vmatpush.msra.mxu0 %v116
  %305 = vmatpush.msra.mxu0 %v115
  %306 = vmatpush.msra.mxu0 %v114
  %307 = vmatmul.f32.gmra.mxu0 %v28
  %v308 = vpop.f32.mrf.mxu0
  %v309 = vadd.f32 %v268, %v308
  %310 = vmatmul.f32.gmra.mxu0 %v35
  %v311 = vpop.f32.mrf.mxu0
  %v312 = vadd.f32 %v271, %v311
  %313 = vmatmul.f32.gmra.mxu0 %v42
  %v314 = vpop.f32.mrf.mxu0
  %v315 = vadd.f32 %v274, %v314
  %316 = vmatmul.f32.gmra.mxu0 %v49
  %v317 = vpop.f32.mrf.mxu0
  %v318 = vadd.f32 %v277, %v317
  %319 = vmatmul.f32.gmra.mxu0 %v56
  %v320 = vpop.f32.mrf.mxu0
  %v321 = vadd.f32 %v280, %v320
  %322 = vmatmul.f32.gmra.mxu0 %v63
  %v323 = vpop.f32.mrf.mxu0
  %v324 = vadd.f32 %v283, %v323
  %325 = vmatmul.f32.gmra.mxu0 %v70
  %v326 = vpop.f32.mrf.mxu0
  %v327 = vadd.f32 %v286, %v326
  %328 = vmatmul.f32.gmra.mxu0 %v77
  %v329 = vpop.f32.mrf.mxu0
  %v330 = vadd.f32 %v289, %v329
  %331 = vdwg.mxu0
  %332 = vmatpush.msra.mxu0 %v145
  %333 = vmatpush.msra.mxu0 %v144
  %334 = vmatpush.msra.mxu0 %v143
  %335 = vmatpush.msra.mxu0 %v142
  %336 = vmatpush.msra.mxu0 %v141
  %337 = vmatpush.msra.mxu0 %v140
  %338 = vmatpush.msra.mxu0 %v139
  %339 = vmatpush.msra.mxu0 %v138
  %340 = vmatpush.msra.mxu0 %v137
  %341 = vmatpush.msra.mxu0 %v136
  %342 = vmatpush.msra.mxu0 %v135
  %343 = vmatpush.msra.mxu0 %v134
  %344 = vmatpush.msra.mxu0 %v133
  %345 = vmatpush.msra.mxu0 %v132
  %346 = vmatpush.msra.mxu0 %v131
  %347 = vmatpush.msra.mxu0 %v130
  %348 = vmatmul.f32.gmra.mxu0 %v29
  %v349 = vpop.f32.mrf.mxu0
  %v350 = vadd.f32 %v309, %v349
  %351 = vmatmul.f32.gmra.mxu0 %v36
  %v352 = vpop.f32.mrf.mxu0
  %v353 = vadd.f32 %v312, %v352
  %354 = vmatmul.f32.gmra.mxu0 %v43
  %v355 = vpop.f32.mrf.mxu0
  %v356 = vadd.f32 %v315, %v355
  %357 = vmatmul.f32.gmra.mxu0 %v50
  %v358 = vpop.f32.mrf.mxu0
  %v359 = vadd.f32 %v318, %v358
  %360 = vmatmul.f32.gmra.mxu0 %v57
  %v361 = vpop.f32.mrf.mxu0
  %v362 = vadd.f32 %v321, %v361
  %363 = vmatmul.f32.gmra.mxu0 %v64
  %v364 = vpop.f32.mrf.mxu0
  %v365 = vadd.f32 %v324, %v364
  %366 = vmatmul.f32.gmra.mxu0 %v71
  %v367 = vpop.f32.mrf.mxu0
  %v368 = vadd.f32 %v327, %v367
  %369 = vmatmul.f32.gmra.mxu0 %v78
  %v370 = vpop.f32.mrf.mxu0
  %v371 = vadd.f32 %v330, %v370
  %372 = vdwg.mxu0
  %373 = vmatpush.msra.mxu0 %v161
  %374 = vmatpush.msra.mxu0 %v160
  %375 = vmatpush.msra.mxu0 %v159
  %376 = vmatpush.msra.mxu0 %v158
  %377 = vmatpush.msra.mxu0 %v157
  %378 = vmatpush.msra.mxu0 %v156
  %379 = vmatpush.msra.mxu0 %v155
  %380 = vmatpush.msra.mxu0 %v154
  %381 = vmatpush.msra.mxu0 %v153
  %382 = vmatpush.msra.mxu0 %v152
  %383 = vmatpush.msra.mxu0 %v151
  %384 = vmatpush.msra.mxu0 %v150
  %385 = vmatpush.msra.mxu0 %v149
  %386 = vmatpush.msra.mxu0 %v148
  %387 = vmatpush.msra.mxu0 %v147
  %388 = vmatpush.msra.mxu0 %v146
  %389 = vmatmul.f32.gmra.mxu0 %v30
  %v390 = vpop.f32.mrf.mxu0
  %v391 = vadd.f32 %v350, %v390
  %392 = vmatmul.f32.gmra.mxu0 %v37
  %v393 = vpop.f32.mrf.mxu0
  %v394 = vadd.f32 %v353, %v393
  %395 = vmatmul.f32.gmra.mxu0 %v44
  %v396 = vpop.f32.mrf.mxu0
  %v397 = vadd.f32 %v356, %v396
  %398 = vmatmul.f32.gmra.mxu0 %v51
  %v399 = vpop.f32.mrf.mxu0
  %v400 = vadd.f32 %v359, %v399
  %401 = vmatmul.f32.gmra.mxu0 %v58
  %v402 = vpop.f32.mrf.mxu0
  %v403 = vadd.f32 %v362, %v402
  %404 = vmatmul.f32.gmra.mxu0 %v65
  %v405 = vpop.f32.mrf.mxu0
  %v406 = vadd.f32 %v365, %v405
  %407 = vmatmul.f32.gmra.mxu0 %v72
  %v408 = vpop.f32.mrf.mxu0
  %v409 = vadd.f32 %v368, %v408
  %410 = vmatmul.f32.gmra.mxu0 %v79
  %v411 = vpop.f32.mrf.mxu0
  %v412 = vadd.f32 %v371, %v411
  %413 = vdwg.mxu0
  %414 = vmatpush.msra.mxu0 %v177
  %415 = vmatpush.msra.mxu0 %v176
  %416 = vmatpush.msra.mxu0 %v175
  %417 = vmatpush.msra.mxu0 %v174
  %418 = vmatpush.msra.mxu0 %v173
  %419 = vmatpush.msra.mxu0 %v172
  %420 = vmatpush.msra.mxu0 %v171
  %421 = vmatpush.msra.mxu0 %v170
  %422 = vmatpush.msra.mxu0 %v169
  %423 = vmatpush.msra.mxu0 %v168
  %424 = vmatpush.msra.mxu0 %v167
  %425 = vmatpush.msra.mxu0 %v166
  %426 = vmatpush.msra.mxu0 %v165
  %427 = vmatpush.msra.mxu0 %v164
  %428 = vmatpush.msra.mxu0 %v163
  %429 = vmatpush.msra.mxu0 %v162
  %430 = vmatmul.f32.gmra.mxu0 %v31
  %v431 = vpop.f32.mrf.mxu0
  %v432 = vadd.f32 %v391, %v431
  %433 = vmatmul.f32.gmra.mxu0 %v38
  %v434 = vpop.f32.mrf.mxu0
  %v435 = vadd.f32 %v394, %v434
  %436 = vmatmul.f32.gmra.mxu0 %v45
  %v437 = vpop.f32.mrf.mxu0
  %v438 = vadd.f32 %v397, %v437
  %439 = vmatmul.f32.gmra.mxu0 %v52
  %v440 = vpop.f32.mrf.mxu0
  %v441 = vadd.f32 %v400, %v440
  %442 = vmatmul.f32.gmra.mxu0 %v59
  %v443 = vpop.f32.mrf.mxu0
  %v444 = vadd.f32 %v403, %v443
  %445 = vmatmul.f32.gmra.mxu0 %v66
  %v446 = vpop.f32.mrf.mxu0
  %v447 = vadd.f32 %v406, %v446
  %448 = vmatmul.f32.gmra.mxu0 %v73
  %v449 = vpop.f32.mrf.mxu0
  %v450 = vadd.f32 %v409, %v449
  %451 = vmatmul.f32.gmra.mxu0 %v80
  %v452 = vpop.f32.mrf.mxu0
  %v453 = vadd.f32 %v412, %v452
  %454 = vdwg.mxu0
  %455 = vmatpush.msra.mxu0 0.0
  %456 = vmatpush.msra.mxu0 0.0
  %457 = vmatpush.msra.mxu0 0.0
  %458 = vmatpush.msra.mxu0 0.0
  %459 = vmatpush.msra.mxu0 0.0
  %460 = vmatpush.msra.mxu0 0.0
  %461 = vmatpush.msra.mxu0 0.0
  %462 = vmatpush.msra.mxu0 0.0
  %463 = vmatpush.msra.mxu0 0.0
  %464 = vmatpush.msra.mxu0 0.0
  %465 = vmatpush.msra.mxu0 0.0
  %466 = vmatpush.msra.mxu0 0.0
  %467 = vmatpush.msra.mxu0 0.0
  %468 = vmatpush.msra.mxu0 0.0
  %469 = vmatpush.msra.mxu0 %v179
  %470 = vmatpush.msra.mxu0 %v178
  %471 = vmatmul.f32.gmra.mxu0 %v186
  %v472 = vpop.f32.mrf.mxu0
  %v473 = vadd.f32 %v432, %v472
  %474 = vmatmul.f32.gmra.mxu0 %v189
  %v475 = vpop.f32.mrf.mxu0
  %v476 = vadd.f32 %v435, %v475
  %477 = vmatmul.f32.gmra.mxu0 %v192
  %v478 = vpop.f32.mrf.mxu0
  %v479 = vadd.f32 %v438, %v478
  %480 = vmatmul.f32.gmra.mxu0 %v195
  %v481 = vpop.f32.mrf.mxu0
  %v482 = vadd.f32 %v441, %v481
  %483 = vmatmul.f32.gmra.mxu0 %v198
  %v484 = vpop.f32.mrf.mxu0
  %v485 = vadd.f32 %v444, %v484
  %486 = vmatmul.f32.gmra.mxu0 %v201
  %v487 = vpop.f32.mrf.mxu0
  %v488 = vadd.f32 %v447, %v487
  %489 = vmatmul.f32.gmra.mxu0 %v204
  %v490 = vpop.f32.mrf.mxu0
  %v491 = vadd.f32 %v450, %v490
  %492 = vmatmul.f32.gmra.mxu0 %v207
  %v493 = vpop.f32.mrf.mxu0
  %v494 = vadd.f32 %v453, %v493
  %495 = vdwg.mxu0
  %v496 = vmax.f32 %v473, 0.0
  %v497 = vmax.f32 %v476, 0.0
  %v498 = vmax.f32 %v479, 0.0
  %v499 = vmax.f32 %v482, 0.0
  %v500 = vmax.f32 %v485, 0.0
  %v501 = vmax.f32 %v488, 0.0
  %v502 = vmax.f32 %v491, 0.0
  %v503 = vmax.f32 %v494, 0.0
  %v504 = vld [vmem:[%s3] sm:$0xff]
  %v505 = vld [vmem:[%s3 + $0x8] sm:$0xff]
  %v506 = vld [vmem:[%s4] sm:$0x1]
  %v508 = vperm.slane %v506, 0
  %v511 = vsel %vm184, %v496, 0
  %v514 = vsel %vm184, %v497, 0
  %v517 = vsel %vm184, %v498, 0
  %v520 = vsel %vm184, %v499, 0
  %v523 = vsel %vm184, %v500, 0
  %v526 = vsel %vm184, %v501, 0
  %v529 = vsel %vm184, %v502, 0
  %v532 = vsel %vm184, %v503, 0
  %534 = vmatpush.msra.mxu0 0.0
  %535 = vmatpush.msra.mxu0 0.0
  %536 = vmatpush.msra.mxu0 0.0
  %537 = vmatpush.msra.mxu0 0.0
  %538 = vmatpush.msra.mxu0 0.0
  %539 = vmatpush.msra.mxu0 0.0
  %540 = vmatpush.msra.mxu0 0.0
  %541 = vmatpush.msra.mxu0 0.0
  %542 = vmatpush.msra.mxu0 0.0
  %543 = vmatpush.msra.mxu0 0.0
  %544 = vmatpush.msra.mxu0 0.0
  %545 = vmatpush.msra.mxu0 0.0
  %546 = vmatpush.msra.mxu0 0.0
  %547 = vmatpush.msra.mxu0 0.0
  %548 = vmatpush.msra.mxu0 %v505
  %549 = vmatpush.msra.mxu0 %v504
  %550 = vmatmul.f32.gmra.mxu0 %v511
  %v551 = vpop.f32.mrf.mxu0
  %v552 = vadd.f32 %v508, %v551
  %553 = vmatmul.f32.gmra.mxu0 %v514
  %v554 = vpop.f32.mrf.mxu0
  %v555 = vadd.f32 %v508, %v554
  %556 = vmatmul.f32.gmra.mxu0 %v517
  %v557 = vpop.f32.mrf.mxu0
  %v558 = vadd.f32 %v508, %v557
  %559 = vmatmul.f32.gmra.mxu0 %v520
  %v560 = vpop.f32.mrf.mxu0
  %v561 = vadd.f32 %v508, %v560
  %562 = vmatmul.f32.gmra.mxu0 %v523
  %v563 = vpop.f32.mrf.mxu0
  %v564 = vadd.f32 %v508, %v563
  %565 = vmatmul.f32.gmra.mxu0 %v526
  %v566 = vpop.f32.mrf.mxu0
  %v567 = vadd.f32 %v508, %v566
  %568 = vmatmul.f32.gmra.mxu0 %v529
  %v569 = vpop.f32.mrf.mxu0
  %v570 = vadd.f32 %v508, %v569
  %571 = vmatmul.f32.gmra.mxu0 %v532
  %v572 = vpop.f32.mrf.mxu0
  %v573 = vadd.f32 %v508, %v572
  %574 = vdwg.mxu0
  %v575 = vmax.f32 %v552, 0.0
  %v576 = vmax.f32 %v555, 0.0
  %v577 = vmax.f32 %v558, 0.0
  %v578 = vmax.f32 %v561, 0.0
  %v579 = vmax.f32 %v564, 0.0
  %v580 = vmax.f32 %v567, 0.0
  %v581 = vmax.f32 %v570, 0.0
  %v582 = vmax.f32 %v573, 0.0
  %v583 = vld [vmem:[%s5] sm:$0xff]
  %v584 = vld [vmem:[%s5 + $0x8] sm:$0xff]
  %v585 = vld [vmem:[%s6] sm:$0x1]
  %v587 = vperm.slane %v585, 0
  %v590 = vsel %vm184, %v575, 0
  %v593 = vsel %vm184, %v576, 0
  %v596 = vsel %vm184, %v577, 0
  %v599 = vsel %vm184, %v578, 0
  %v602 = vsel %vm184, %v579, 0
  %v605 = vsel %vm184, %v580, 0
  %v608 = vsel %vm184, %v581, 0
  %v611 = vsel %vm184, %v582, 0
  %613 = vmatpush.msra.mxu0 0.0
  %614 = vmatpush.msra.mxu0 0.0
  %615 = vmatpush.msra.mxu0 0.0
  %616 = vmatpush.msra.mxu0 0.0
  %617 = vmatpush.msra.mxu0 0.0
  %618 = vmatpush.msra.mxu0 0.0
  %619 = vmatpush.msra.mxu0 0.0
  %620 = vmatpush.msra.mxu0 0.0
  %621 = vmatpush.msra.mxu0 0.0
  %622 = vmatpush.msra.mxu0 0.0
  %623 = vmatpush.msra.mxu0 0.0
  %624 = vmatpush.msra.mxu0 0.0
  %625 = vmatpush.msra.mxu0 0.0
  %626 = vmatpush.msra.mxu0 0.0
  %627 = vmatpush.msra.mxu0 %v584
  %628 = vmatpush.msra.mxu0 %v583
  %629 = vmatmul.f32.gmra.mxu0 %v590
  %v630 = vpop.f32.mrf.mxu0
  %v631 = vadd.f32 %v587, %v630
  %632 = vmatmul.f32.gmra.mxu0 %v593
  %v633 = vpop.f32.mrf.mxu0
  %v634 = vadd.f32 %v587, %v633
  %635 = vmatmul.f32.gmra.mxu0 %v596
  %v636 = vpop.f32.mrf.mxu0
  %v637 = vadd.f32 %v587, %v636
  %638 = vmatmul.f32.gmra.mxu0 %v599
  %v639 = vpop.f32.mrf.mxu0
  %v640 = vadd.f32 %v587, %v639
  %641 = vmatmul.f32.gmra.mxu0 %v602
  %v642 = vpop.f32.mrf.mxu0
  %v643 = vadd.f32 %v587, %v642
  %644 = vmatmul.f32.gmra.mxu0 %v605
  %v645 = vpop.f32.mrf.mxu0
  %v646 = vadd.f32 %v587, %v645
  %647 = vmatmul.f32.gmra.mxu0 %v608
  %v648 = vpop.f32.mrf.mxu0
  %v649 = vadd.f32 %v587, %v648
  %650 = vmatmul.f32.gmra.mxu0 %v611
  %v651 = vpop.f32.mrf.mxu0
  %v652 = vadd.f32 %v587, %v651
  %653 = vdwg.mxu0
  %vm654 = vcmask 80896
  %655 = vst.msk [vmem:[%s7] sm:$0xff] %vm654, %v631
  %656 = vst.msk [vmem:[%s7 + $0x8] sm:$0xff] %vm654, %v634
  %657 = vst.msk [vmem:[%s7 + $0x10] sm:$0xff] %vm654, %v637
  %658 = vst.msk [vmem:[%s7 + $0x18] sm:$0xff] %vm654, %v640
  %659 = vst.msk [vmem:[%s7 + $0x20] sm:$0xff] %vm654, %v643
  %660 = vst.msk [vmem:[%s7 + $0x28] sm:$0xff] %vm654, %v646
  %661 = vst.msk [vmem:[%s7 + $0x30] sm:$0xff] %vm654, %v649
  %662 = vst.msk [vmem:[%s7 + $0x38] sm:$0xff] %vm654, %v652
  // Predicated region
  $region30: #{tpu_custom_call.1} parent=0 // pred_check
    _
  $region31: #{tpu_custom_call.1} parent=0 // pred_check_branch
    %664 = sbr.rel (0) target = $region33
  $region32: #{tpu_custom_call.1} parent=0 // pred_region
    _
  $region33: #{tpu_custom_call.1} parent=0 // pred_fallthru
    _
  // Predicated region
  $region34: #{tpu_custom_call.1} parent=0 // pred_check
    _
  $region35: #{tpu_custom_call.1} parent=0 // pred_check_branch
    %666 = sbr.rel (0) target = $region37
  $region36: #{tpu_custom_call.1} parent=0 // pred_region
    _
  $region37: #{tpu_custom_call.1} parent=0 // pred_fallthru
    _

</llo_original>
